<compile_context>
chip_gen: v6e
topology: v6e:2x2x1
jax: 0.10.0
libtpu: 0.0.40
codegen_flags: <defaults>
</compile_context>

<pallas_src>
import jax
import jax.numpy as jnp
from jax.experimental import pallas as pl
from jax.experimental.pallas import tpu as pltpu

_LANE = 128


def _round_up(x, m):
    return ((x + m - 1) // m) * m


def _padded_vmem_bytes(shape, dtype):
    """Rough VMEM occupancy of a 2-D array including (sublane, 128) tile padding."""
    itemsize = jnp.dtype(dtype).itemsize
    sub = {4: 8, 2: 16, 1: 32}.get(itemsize, 8)
    rows = _round_up(shape[-2], sub)
    cols = _round_up(shape[-1], _LANE)
    lead = 1
    for d in shape[:-2]:
        lead *= int(d)
    return lead * rows * cols * itemsize


# -----------------------------------------------------------------------------
# Kernel body (shared by the gridless small path and the class-tiled path).
# x block: [B, D] (resident).  w block: [D, tn] (streamed).  One MXU dot.
# -----------------------------------------------------------------------------
def _unit_classifier_kernel(x_ref, w_ref, o_ref):
    o_ref[...] = jnp.dot(
        x_ref[...], w_ref[...], preferred_element_type=jnp.float32
    ).astype(o_ref.dtype)


# -----------------------------------------------------------------------------
# Init-time parameter preparation (hoisted out of the forward pass).
# -----------------------------------------------------------------------------
def make_unit_classifier_weight(key, num_attr_vectors, attr_dim, classes):
    """Mimics UnitClassifier.__init__: select attribute vectors for `classes`
    and L2-normalize each row. Returns PyTorch-layout weight [C, D]."""
    attributes = jax.random.normal(key, (num_attr_vectors, attr_dim), jnp.float32)
    sel = attributes[classes]                                      # [C, D]
    norms = jnp.sqrt(jnp.sum(sel * sel, axis=-1, keepdims=True))
    return sel / norms                                             # unit rows


def prepare_unit_classifier_params(weight, *, dtype=jnp.float32):
    """One-time preprocessing of the fixed head: pad C up to a multiple of 128,
    cast to `dtype` (e.g. bf16 on v6e/v7x), and transpose to [D, Cp] so the
    kernel runs a plain MXU dot. Returns (w_t [D, Cp], num_real_classes)."""
    C, D = weight.shape
    Cp = _round_up(C, _LANE)
    w = jnp.pad(weight, ((0, Cp - C), (0, 0))) if Cp != C else weight
    w_t = jnp.asarray(w.T, dtype=dtype)                            # [D, Cp]
    return w_t, C


# -----------------------------------------------------------------------------
# Forward pass.
# -----------------------------------------------------------------------------
def unit_classifier_forward(x, w_t, num_classes=None, *, tn_max=512,
                            force_tiled=False, slice_output=True,
                            small_path_bytes=8 * 1024 * 1024):
    """x: [B, D] activations.  w_t: [D, Cp] prepared weight (see
    prepare_unit_classifier_params).  Returns x @ fc.weight.T of shape [B, C]
    (or the padded [B, Cp] logits if slice_output=False; pad classes are 0 and
    must be masked downstream in that case)."""
    B, D = x.shape
    Dw, Cp = w_t.shape
    assert D == Dw, (D, Dw)
    out_dtype = x.dtype
    C = Cp if num_classes is None else num_classes

    if x.dtype != w_t.dtype:
        # Single per-call cast of the activations; the weight was cast at init.
        x = x.astype(w_t.dtype)

    resident = (_padded_vmem_bytes((B, D), x.dtype)
                + _padded_vmem_bytes((D, Cp), w_t.dtype)
                + _padded_vmem_bytes((B, Cp), out_dtype))

    if not force_tiled and resident <= small_path_bytes:
        # ---- gridless single shot: everything resident in VMEM --------------
        out = pl.pallas_call(
            _unit_classifier_kernel,
            out_shape=jax.ShapeDtypeStruct((B, Cp), out_dtype),
            in_specs=[
                pl.BlockSpec(memory_space=pltpu.MemorySpace.VMEM),
                pl.BlockSpec(memory_space=pltpu.MemorySpace.VMEM),
            ],
            out_specs=pl.BlockSpec(memory_space=pltpu.MemorySpace.VMEM),
        )(x, w_t)
        return out[:, :C] if (slice_output and C != Cp) else out

    # ---- class-tiled path: x resident (DMA'd once), weight streamed once ----
    if Cp <= tn_max:
        tn = Cp
    else:
        tn = tn_max
        while Cp % tn:        # Cp is a multiple of 128, so this terminates >= 128
            tn -= _LANE

    grid = (Cp // tn,)
    out = pl.pallas_call(
        _unit_classifier_kernel,
        out_shape=jax.ShapeDtypeStruct((B, Cp), out_dtype),
        grid=grid,
        in_specs=[
            # Whole batch per step, constant block index -> fetched from HBM once.
            pl.BlockSpec((B, D), lambda j: (0, 0)),
            # One class slab per step -> weight streams through HBM exactly once.
            pl.BlockSpec((D, tn), lambda j: (0, j)),
        ],
        out_specs=pl.BlockSpec((B, tn), lambda j: (0, j)),
        compiler_params=pltpu.CompilerParams(
            dimension_semantics=("parallel",),
        ),
    )(x, w_t)
    return out[:, :C] if (slice_output and C != Cp) else out


if __name__ == "__main__":
    key = jax.random.PRNGKey(0)
    k_attr, k_x, k_attr2, k_x2 = jax.random.split(key, 4)

    # ---- 1) module-scale shapes: small gridless path (f32) ------------------
    B, D, NUM_ATTR = 8, 32, 24
    classes = jnp.arange(16)                                       # 16 classes
    weight = make_unit_classifier_weight(k_attr, NUM_ATTR, D, classes)   # [16, 32]
    w_t, C = prepare_unit_classifier_params(weight)                      # [32, 128]
    x = jax.random.normal(k_x, (B, D), jnp.float32)                      # [8, 32]

    out = jax.block_until_ready(unit_classifier_forward(x, w_t, C))
    ref = x @ weight.T
    assert out.shape == (B, C)
    assert jnp.allclose(out, ref, atol=1e-5, rtol=1e-5)

    # ---- 2) production-structure check: tiled path, bf16 weights ------------
    B2, D2, NUM_ATTR2 = 200, 320, 512
    classes2 = jnp.arange(300)                                     # 300 classes
    weight2 = make_unit_classifier_weight(k_attr2, NUM_ATTR2, D2, classes2)
    w_t2, C2 = prepare_unit_classifier_params(weight2, dtype=jnp.bfloat16)
    x2 = jax.random.normal(k_x2, (B2, D2), jnp.float32)

    out2 = jax.block_until_ready(
        unit_classifier_forward(x2, w_t2, C2, force_tiled=True)
    )
    ref2 = x2 @ weight2.T
    assert out2.shape == (B2, C2)
    # bf16 inputs, f32 accumulation -> relaxed tolerance.
    assert jnp.allclose(out2, ref2, atol=5e-2, rtol=5e-2)

    print("KERNEL_OK")
</pallas_src>

<mosaic_0001>
module attributes {stable_mosaic.version = 11 : i64} {
  func.func @_unit_classifier_kernel(%arg0: memref<8x32xf32, #tpu.memory_space<vmem>>, %arg1: memref<32x128xf32, #tpu.memory_space<vmem>>, %arg2: memref<8x128xf32, #tpu.memory_space<vmem>>) attributes {dimension_semantics = [], scalar_prefetch = 0 : i64, scratch_operands = 0 : i64, tpu.core_type = #tpu.core_type<tc>} {
    %c0 = arith.constant 0 : index
    %c0_0 = arith.constant 0 : index
    %0 = vector.load %arg0[%c0, %c0_0] : memref<8x32xf32, #tpu.memory_space<vmem>>, vector<8x32xf32>
    %c0_1 = arith.constant 0 : index
    %c0_2 = arith.constant 0 : index
    %1 = vector.load %arg1[%c0_1, %c0_2] : memref<32x128xf32, #tpu.memory_space<vmem>>, vector<32x128xf32>
    %cst = arith.constant dense<0.000000e+00> : vector<8x128xf32>
    %2 = tpu.matmul %0, %1, %cst {dimension_numbers = #tpu.dot_dimension_numbers<[1], [0], [0], [1], [0, 0, 1, 1], [], []>} : vector<8x32xf32>, vector<32x128xf32>, vector<8x128xf32> -> vector<8x128xf32>
    %c0_3 = arith.constant 0 : index
    %c0_4 = arith.constant 0 : index
    %3 = vector.load %arg2[%c0_3, %c0_4] : memref<8x128xf32, #tpu.memory_space<vmem>>, vector<8x128xf32>
    tpu.vector_store %arg2[%c0_3, %c0_4], %2 {strides = array<i32>} : memref<8x128xf32, #tpu.memory_space<vmem>>, vector<8x128xf32>,
    return
  }
}

</mosaic_0001>

<llo_original>
// kernel: tpu_custom_call.1
$region0: #{tpu_custom_call.1}
  #allocation0 [shape = 'u32[]', space=smem, size = 0x4, offset = 0x4, fixed_abs, tag = 'smem constant byte address 0x4 - core index']
  #allocation1 [shape = 'u32[144,128]{1,0:T(1,128)}', space=vmem, size = 0x12000, scoped, tag = 'internal scratch']
  %s0 = inlined_call_operand.hbm [shape: f32[8,32], index: 0, kind: input, shape index: {}]
  %s1 = inlined_call_operand.hbm [shape: f32[32,128], index: 1, kind: input, shape index: {}]
  %s2 = inlined_call_operand.hbm [shape: f32[8,128], index: 2, kind: output, shape index: {}]
  %s3 = sld [smem:[#allocation0]]
  $region26: #{tpu_custom_call.1} parent=0
    _
  %s5 = ssub.s32 1, %s3
  %s6 = scalar_select 0, %s5, %s3
  $region1: #{tpu_custom_call.1} parent=0
    #allocation2 [shape = 'u8[4096]{0}', space=vmem, size = 0x1000, scoped, tag = 'input window, operand 0, single buffered']
    #allocation3 [shape = 's32[1]{0}', space=sflag, size = 0x4, scoped, tag = 'scoped memory for tpu_custom_call.1']
    #allocation4 [shape = 's32[1]{0}', space=sflag, size = 0x4, scoped, tag = 'scoped memory for tpu_custom_call.1']
    #allocation5 [shape = 'u8[16384]{0}', space=vmem, size = 0x4000, scoped, tag = 'input window, operand 1, single buffered']
    #allocation6 [shape = 's32[1]{0}', space=sflag, size = 0x4, scoped, tag = 'scoped memory for tpu_custom_call.1']
    #allocation7 [shape = 'u8[4096]{0}', space=vmem, size = 0x1000, scoped, tag = 'output window, operand 0, single buffered']
    %7 = vsyncpa [#allocation3], 0
    %8 = vsyncpa [#allocation6], 0
    %9 = vsyncpa [#allocation4], 0
    // Predicated region
    $region2: #{tpu_custom_call.1} parent=1 // pred_check
      _
    $region3: #{tpu_custom_call.1} parent=1 // pred_check_branch
      %11 = sbr.rel (0) target = $region5
    $region4: #{tpu_custom_call.1} parent=1 // pred_region
      %s13 = ssub.s32 128, 128
      %14 = vsyncadd [#allocation3], %s13
      %s16 = sshll.u32 [#allocation2], 4
      %s17 = int_to_ptr.vmem [resolvable:$true] %s16
      %19 = dma.hbm_to_vmem [thread:$0]  %s0, 128, %s17, [#allocation3]
    $region5: #{tpu_custom_call.1} parent=1 // pred_fallthru
      _
    // Predicated region
    $region6: #{tpu_custom_call.1} parent=1 // pred_check
      _
    $region7: #{tpu_custom_call.1} parent=1 // pred_check_branch
      %21 = sbr.rel (0) target = $region9
    $region8: #{tpu_custom_call.1} parent=1 // pred_region
      %s23 = ssub.s32 512, 512
      %24 = vsyncadd [#allocation6], %s23
      %s25 = sshll.u32 [#allocation5], 4
      %s26 = int_to_ptr.vmem [resolvable:$true] %s25
      %31 = dma.hbm_to_vmem [thread:$0]  %s1, 512, %s26, [#allocation6], 128, 128, 8
    $region9: #{tpu_custom_call.1} parent=1 // pred_fallthru
      _
    // Predicated region
    $region10: #{tpu_custom_call.1} parent=1 // pred_check
      _
    $region11: #{tpu_custom_call.1} parent=1 // pred_check_branch
      %33 = sbr.rel (0) target = $region13
    $region12: #{tpu_custom_call.1} parent=1 // pred_region
      %34 = dma.done [#allocation3], 128
    $region13: #{tpu_custom_call.1} parent=1 // pred_fallthru
      _
    // Predicated region
    $region14: #{tpu_custom_call.1} parent=1 // pred_check
      _
    $region15: #{tpu_custom_call.1} parent=1 // pred_check_branch
      %36 = sbr.rel (0) target = $region17
    $region16: #{tpu_custom_call.1} parent=1 // pred_region
      %37 = dma.done [#allocation6], 512
    $region17: #{tpu_custom_call.1} parent=1 // pred_fallthru
      _
    %v38 = vld [vmem:[#allocation2] sm:$0xff]
    %v39 = vld [vmem:[#allocation5] sm:$0xff]
    %v40 = vld [vmem:[#allocation5 + $0x8] sm:$0xff]
    %v41 = vld [vmem:[#allocation5 + $0x10] sm:$0xff]
    %v42 = vld [vmem:[#allocation5 + $0x18] sm:$0xff]
    %vm43 = vcmask 261120
    %v45 = vsel %vm43, %v38, 0
    %47 = vmatprep.subr.mxu0 0.0
    %48 = vmatpush1.msra.mxu0 0.0
    %49 = vmatprep.subr.mxu0 0.0
    %50 = vmatpush1.msra.mxu0 0.0
    %51 = vmatprep.subr.mxu0 0.0
    %52 = vmatpush1.msra.mxu0 0.0
    %53 = vmatprep.subr.mxu0 0.0
    %54 = vmatpush1.msra.mxu0 0.0
    %55 = vmatprep.subr.mxu0 0.0
    %56 = vmatpush1.msra.mxu0 0.0
    %57 = vmatprep.subr.mxu0 0.0
    %58 = vmatpush1.msra.mxu0 0.0
    %59 = vmatprep.subr.mxu0 0.0
    %60 = vmatpush1.msra.mxu0 0.0
    %61 = vmatprep.subr.mxu0 0.0
    %62 = vmatpush1.msra.mxu0 0.0
    %63 = vmatprep.subr.mxu0 0.0
    %64 = vmatpush1.msra.mxu0 0.0
    %65 = vmatprep.subr.mxu0 0.0
    %66 = vmatpush1.msra.mxu0 0.0
    %67 = vmatprep.subr.mxu0 0.0
    %68 = vmatpush1.msra.mxu0 0.0
    %69 = vmatprep.subr.mxu0 0.0
    %70 = vmatpush1.msra.mxu0 0.0
    %71 = vmatprep.subr.mxu0 0.0
    %72 = vmatpush1.msra.mxu0 %v42
    %73 = vmatprep.subr.mxu0 0.0
    %74 = vmatpush1.msra.mxu0 %v41
    %75 = vmatprep.subr.mxu0 0.0
    %76 = vmatpush1.msra.mxu0 %v40
    %77 = vmatprep.subr.mxu0 0.0
    %78 = vmatpush1.msra.mxu0 %v39
    %79 = vmatprep.subr.mxu0 0.0
    %80 = vmatpush2.msra.mxu0 0.0
    %81 = vmatprep.subr.mxu0 0.0
    %82 = vmatpush2.msra.mxu0 0.0
    %83 = vmatprep.subr.mxu0 0.0
    %84 = vmatpush2.msra.mxu0 0.0
    %85 = vmatprep.subr.mxu0 0.0
    %86 = vmatpush2.msra.mxu0 0.0
    %87 = vmatprep.subr.mxu0 0.0
    %88 = vmatpush2.msra.mxu0 0.0
    %89 = vmatprep.subr.mxu0 0.0
    %90 = vmatpush2.msra.mxu0 0.0
    %91 = vmatprep.subr.mxu0 0.0
    %92 = vmatpush2.msra.mxu0 0.0
    %93 = vmatprep.subr.mxu0 0.0
    %94 = vmatpush2.msra.mxu0 0.0
    %95 = vmatprep.subr.mxu0 0.0
    %96 = vmatpush2.msra.mxu0 0.0
    %97 = vmatprep.subr.mxu0 0.0
    %98 = vmatpush2.msra.mxu0 0.0
    %99 = vmatprep.subr.mxu0 0.0
    %100 = vmatpush2.msra.mxu0 0.0
    %101 = vmatprep.subr.mxu0 0.0
    %102 = vmatpush2.msra.mxu0 0.0
    %103 = vmatprep.subr.mxu0 0.0
    %104 = vmatpush2.msra.mxu0 0.0
    %105 = vmatprep.subr.mxu0 0.0
    %106 = vmatpush2.msra.mxu0 0.0
    %107 = vmatprep.subr.mxu0 0.0
    %108 = vmatpush2.msra.mxu0 0.0
    %109 = vmatprep.subr.mxu0 0.0
    %110 = vmatpush2.msra.mxu0 0.0
    %111 = vmatprep.mubr.f32.mxu0 0.0
    %112 = vmatmul.mubr.f32.gmra.mxu0 %v45
    %v113 = vpop.f32.mrf.mxu0
    %v114 = vadd.f32 0.0, %v113
    %v115 = vpop.f32.mrf.mxu0
    %116 = vdwg.mxu0
    %117 = vst [vmem:[#allocation7] sm:$0xff] %v114
    // Predicated region
    $region18: #{tpu_custom_call.1} parent=1 // pred_check
      _
    $region19: #{tpu_custom_call.1} parent=1 // pred_check_branch
      %119 = sbr.rel (0) target = $region21
    $region20: #{tpu_custom_call.1} parent=1 // pred_region
      %s121 = ssub.s32 128, 128
      %122 = vsyncadd [#allocation4], %s121
      %s124 = sshll.u32 [#allocation7], 4
      %s125 = int_to_ptr.vmem [resolvable:$true] %s124
      %127 = dma.vmem_to_hbm [thread:$0]  %s125, 128, %s2, [#allocation4]
    $region21: #{tpu_custom_call.1} parent=1 // pred_fallthru
      _
    // Predicated region
    $region22: #{tpu_custom_call.1} parent=1 // pred_check
      _
    $region23: #{tpu_custom_call.1} parent=1 // pred_check_branch
      %129 = sbr.rel (0) target = $region25
    $region24: #{tpu_custom_call.1} parent=1 // pred_region
      %130 = dma.done [#allocation4], 128
    $region25: #{tpu_custom_call.1} parent=1 // pred_fallthru
      _
    %131 = vsyncpa [#allocation3], 1
    %132 = vsyncpa [#allocation6], 1
    %133 = vsyncpa [#allocation4], 1

</llo_original>
